<compile_context>
chip_gen: v5e
topology: v5e:2x2
jax: 0.10.0
libtpu: 0.0.40
codegen_flags: <defaults>
</compile_context>

<pallas_src>
import functools

import jax
import jax.numpy as jnp
from jax.experimental import pallas as pl
from jax.experimental.pallas import tpu as pltpu

_FEATURES = 21

# Contract the last dim of both operands: (1, F) x (TB, F) -> (1, TB) on the MXU.
_TRANS_B_DIMS = (((1,), (1,)), ((), ()))


def _round_up(n: int, m: int) -> int:
    return ((n + m - 1) // m) * m


def _vmem_capacity_bytes() -> int:
    """Physical VMEM per TensorCore; conservative 64 MiB (v7x) fallback."""
    try:
        info = pltpu.get_tpu_info()
        cap = int(getattr(info, "vmem_capacity_bytes", 0))
        if cap > 0:
            return cap
    except Exception:
        pass
    return 64 * 1024 * 1024


# Queried once at import time (outside any trace).
_VMEM_CAP = _vmem_capacity_bytes()
# Leave headroom below physical capacity: 96 MiB on v5e/v6e, 48 MiB on v7x.
_VMEM_LIMIT = (_VMEM_CAP * 3) // 4
# Default batch tile: 32768 rows (16 MiB lane-padded, 32 MiB double-buffered)
# on 128-MiB-VMEM chips; 16384 rows (8 MiB / 16 MiB) on v7x.
_DEFAULT_BLOCK_ROWS = 32768 if _VMEM_CAP >= 128 * 1024 * 1024 else 16384
# Clamp so double-buffered lane-padded f32 slab + bf16 temp + output buffers
# (~1536 B/row, conservative) stay well inside the limit.
_MAX_TB = max(128, (((_VMEM_LIMIT - (8 << 20)) // 1536) // 128) * 128)


def _lr_kernel(x_ref, w_ref, b_ref, o_ref):
    # x_ref: (TB, F) VMEM; w_ref: (1, F) VMEM; b_ref: (1,) f32 SMEM; o_ref: (1, TB) VMEM.
    x_bf = x_ref[...].astype(jnp.bfloat16)          # single-pass MXU operand
    w_bf = w_ref[...].astype(jnp.bfloat16)
    logits = jax.lax.dot_general(
        w_bf, x_bf, _TRANS_B_DIMS,
        preferred_element_type=jnp.float32,          # f32 accumulation
    )                                                # (1, TB), lane-dense
    logits = logits + b_ref[0]
    o_ref[...] = jax.nn.sigmoid(logits).astype(o_ref.dtype)


@functools.partial(jax.jit, static_argnames=("block_rows",))
def lr_forward(x, weight, bias, *, block_rows: int | None = None):
    """sigmoid(x @ weight.T + bias).

    x: (B, 21); weight: (1, 21) (PyTorch nn.Linear layout); bias: (1,).
    Returns (B, 1) in x.dtype (bf16 matmul, f32 accumulation / bias / sigmoid).
    """
    B, F = x.shape
    assert weight.shape == (1, F) and bias.shape == (1,)

    if block_rows is None:
        block_rows = _DEFAULT_BLOCK_ROWS

    # Requested tile, multiple of 128 (lane-dense output), clamped to VMEM budget.
    tb_req = min(_round_up(block_rows, 128), _MAX_TB)

    if B > 2 * tb_req:
        tb = tb_req
    else:
        # Give the megacore at least 2 tiles when possible (v7x both TCs work);
        # for tiny batches (B <= 128) fall back to one exact full-array block.
        half = _round_up(pl.cdiv(B, 2), 128)
        tb = half if half < B else B
    num_tiles = pl.cdiv(B, tb)

    b = bias.astype(jnp.float32).reshape(1)  # scalar in SMEM

    out = pl.pallas_call(
        _lr_kernel,
        out_shape=jax.ShapeDtypeStruct((1, B), x.dtype),
        grid=(num_tiles,),
        in_specs=[
            pl.BlockSpec((tb, F), lambda i: (i, 0)),            # streamed x slab
            pl.BlockSpec((1, F), lambda i: (0, 0)),             # resident weight
            pl.BlockSpec(memory_space=pltpu.MemorySpace.SMEM),  # bias scalar
        ],
        out_specs=pl.BlockSpec((1, tb), lambda i: (0, i)),      # lane-dense output row
        compiler_params=pltpu.CompilerParams(
            dimension_semantics=("parallel",),   # megacore sharding on v7x
            vmem_limit_bytes=_VMEM_LIMIT,
        ),
        cost_estimate=pl.CostEstimate(
            flops=2 * B * F,
            transcendentals=B,
            bytes_accessed=B * F * x.dtype.itemsize + B * x.dtype.itemsize + F * 4 + 4,
        ),
    )(x, weight, b)

    # (1, B) -> (B, 1) is free in row-major layout.
    return out.reshape(B, 1)


if __name__ == "__main__":
    key = jax.random.PRNGKey(0)
    kx, kw, kb = jax.random.split(key, 3)

    F = _FEATURES
    # Deterministic init mimicking nn.Linear: U(-1/sqrt(F), 1/sqrt(F))
    bound = 1.0 / (F ** 0.5)
    weight = jax.random.uniform(kw, (1, F), jnp.float32, -bound, bound)
    bias = jax.random.uniform(kb, (1,), jnp.float32, -bound, bound)

    def reference(x):
        return jax.nn.sigmoid(x @ weight.T + bias)

    # Small case: whole batch in one exact full-array block (grid of 1).
    x_small = jax.random.normal(kx, (8, F), dtype=jnp.float32)
    out_small = lr_forward(x_small, weight, bias)
    jax.block_until_ready(out_small)
    assert out_small.shape == (8, 1)
    # bf16 matmul => ~1e-3 level differences vs f32 reference.
    assert jnp.allclose(out_small, reference(x_small), atol=5e-3), "small-batch mismatch"

    # Ragged multi-tile case: exercises batch tiling, partial last block, pipeline.
    x_big = jax.random.normal(kx, (300, F), dtype=jnp.float32)
    out_big = lr_forward(x_big, weight, bias, block_rows=128)
    jax.block_until_ready(out_big)
    assert out_big.shape == (300, 1)
    assert jnp.allclose(out_big, reference(x_big), atol=5e-3), "tiled-batch mismatch"

    print("KERNEL_OK")
</pallas_src>

<mosaic_0001>
module attributes {stable_mosaic.version = 11 : i64} {
  func.func @_lr_kernel(%arg0: i32, %arg1: memref<8x21xf32, #tpu.memory_space<vmem>>, %arg2: memref<1x21xf32, #tpu.memory_space<vmem>>, %arg3: memref<1xf32, #tpu.memory_space<smem>>, %arg4: memref<1x8xf32, #tpu.memory_space<vmem>>) attributes {dimension_semantics = [#tpu.dimension_semantics<parallel>], iteration_bounds = array<i64: 1>, scalar_prefetch = 0 : i64, scratch_operands = 0 : i64, tpu.core_type = #tpu.core_type<tc>, window_params = [{transform_indices = @transform_0, window_bounds = array<i64: 8, 21>}, {pipeline_mode = #tpu.pipeline_mode<synchronous>, transform_indices = @transform_1, window_bounds = array<i64: 1, 21>}, {transform_indices = @transform_2, window_bounds = array<i64: 1>}, {transform_indices = @transform_3, window_bounds = array<i64: 1, 8>}]} {
    %c0 = arith.constant 0 : index
    %c0_0 = arith.constant 0 : index
    %0 = vector.load %arg1[%c0, %c0_0] : memref<8x21xf32, #tpu.memory_space<vmem>>, vector<8x21xf32>
    %1 = arith.truncf %0 : vector<8x21xf32> to vector<8x21xbf16>
    %c0_1 = arith.constant 0 : index
    %c0_2 = arith.constant 0 : index
    %2 = vector.load %arg2[%c0_1, %c0_2] : memref<1x21xf32, #tpu.memory_space<vmem>>, vector<1x21xf32>
    %3 = arith.truncf %2 : vector<1x21xf32> to vector<1x21xbf16>
    %cst = arith.constant dense<0.000000e+00> : vector<1x8xf32>
    %4 = tpu.matmul %3, %1, %cst {dimension_numbers = #tpu.dot_dimension_numbers<[1], [1], [0], [0], [0, 0, 1, 0], [], []>} : vector<1x21xbf16>, vector<8x21xbf16>, vector<1x8xf32> -> vector<1x8xf32>
    %c0_3 = arith.constant 0 : index
    %5 = memref.load %arg3[%c0_3] : memref<1xf32, #tpu.memory_space<smem>>
    %6 = vector.broadcast %5 : f32 to vector<1x8xf32>
    %7 = arith.addf %4, %6 : vector<1x8xf32>
    %8 = arith.negf %7 : vector<1x8xf32>
    %9 = math.exp %8 : vector<1x8xf32>
    %cst_4 = arith.constant 1.000000e+00 : f32
    %10 = vector.broadcast %cst_4 : f32 to vector<1x8xf32>
    %11 = arith.addf %10, %9 : vector<1x8xf32>
    %12 = arith.divf %10, %11 : vector<1x8xf32>
    %c0_5 = arith.constant 0 : index
    %c0_6 = arith.constant 0 : index
    %13 = vector.load %arg4[%c0_5, %c0_6] : memref<1x8xf32, #tpu.memory_space<vmem>>, vector<1x8xf32>
    tpu.vector_store %arg4[%c0_5, %c0_6], %12 {strides = array<i32>} : memref<1x8xf32, #tpu.memory_space<vmem>>, vector<1x8xf32>,
    return
  }
  func.func @transform_0(%arg0: i32) -> (i32, i32) {
    %c0_i32 = arith.constant 0 : i32
    %c0_i32_0 = arith.constant 0 : i32
    return %arg0, %c0_i32 : i32, i32
  }
  func.func @transform_1(%arg0: i32) -> (i32, i32) {
    %c0_i32 = arith.constant 0 : i32
    %c0_i32_0 = arith.constant 0 : i32
    %c0_i32_1 = arith.constant 0 : i32
    return %c0_i32, %c0_i32_0 : i32, i32
  }
  func.func @transform_2(%arg0: i32) -> i32 {
    %c0_i32 = arith.constant 0 : i32
    %c0_i32_0 = arith.constant 0 : i32
    return %c0_i32 : i32
  }
  func.func @transform_3(%arg0: i32) -> (i32, i32) {
    %c0_i32 = arith.constant 0 : i32
    %c0_i32_0 = arith.constant 0 : i32
    return %c0_i32, %arg0 : i32, i32
  }
}

</mosaic_0001>

<llo_original>
// kernel: lr_forward.1
$region0: #{lr_forward.1}
  #allocation0 [shape = 'u32[]', space=smem, size = 0x4, offset = 0x4, fixed_abs, tag = 'smem constant byte address 0x4 - core index']
  #allocation1 [shape = 'u32[72,128]{1,0:T(1,128)}', space=vmem, size = 0x9000, scoped, tag = 'internal scratch']
  #allocation2 [shape = 'f32[1]{0:T(128)S(6)}', space=smem, size = 0x200, scoped, tag = 'scoped memory for lr_forward.1']
  %s0 = inlined_call_operand.hbm [shape: f32[8,21], index: 0, kind: input, shape index: {}]
  %s1 = inlined_call_operand.vmem [shape: f32[1,21], index: 1, kind: input, shape index: {}]
  %s2 = inlined_call_operand.<no memory space> [shape: f32[1], index: 2, kind: input, shape index: {}]
  %s3 = inlined_call_operand.hbm [shape: f32[1,8], index: 3, kind: output, shape index: {}]
  %s4 = sld [smem:[#allocation0]]
  $region26: #{lr_forward.1} parent=0
    _
  %s6 = ssub.s32 1, %s4
  %s7 = scalar_select 0, %s6, %s4
  %8 = sst [smem:[#allocation2]] %s2
  $region1: #{lr_forward.1} parent=0
    #allocation3 [shape = 'u8[4096]{0}', space=vmem, size = 0x1000, scoped, tag = 'input window, operand 0, single buffered']
    #allocation4 [shape = 's32[1]{0}', space=sflag, size = 0x4, scoped, tag = 'scoped memory for lr_forward.1']
    #allocation5 [shape = 's32[1]{0}', space=sflag, size = 0x4, scoped, tag = 'scoped memory for lr_forward.1']
    #allocation6 [shape = 'u8[512]{0}', space=vmem, size = 0x400, scoped, tag = 'output window, operand 0, single buffered']
    %9 = vsyncpa [#allocation4], 0
    %10 = vsyncpa [#allocation5], 0
    // Predicated region
    $region2: #{lr_forward.1} parent=1 // pred_check
      _
    $region3: #{lr_forward.1} parent=1 // pred_check_branch
      %12 = sbr.rel (0) target = $region5
    $region4: #{lr_forward.1} parent=1 // pred_region
      %14 = vsyncadd [#allocation4], 0
      %s16 = sshll.u32 %s0, 4
      %s17 = int_to_ptr.hbm [resolvable:$true] %s16
      %s18 = sshll.u32 [#allocation3], 4
      %s19 = int_to_ptr.vmem [resolvable:$true] %s18
      %21 = dma.hbm_to_vmem [thread:$0]  %s17, 128, %s19, [#allocation4]
    $region5: #{lr_forward.1} parent=1 // pred_fallthru
      _
    // Predicated region
    $region6: #{lr_forward.1} parent=1 // pred_check
      _
    $region7: #{lr_forward.1} parent=1 // pred_check_branch
      %23 = sbr.rel (0) target = $region9
    $region8: #{lr_forward.1} parent=1 // pred_region
      _
    $region9: #{lr_forward.1} parent=1 // pred_fallthru
      _
    // Predicated region
    $region10: #{lr_forward.1} parent=1 // pred_check
      _
    $region11: #{lr_forward.1} parent=1 // pred_check_branch
      %25 = sbr.rel (0) target = $region13
    $region12: #{lr_forward.1} parent=1 // pred_region
      _
    $region13: #{lr_forward.1} parent=1 // pred_fallthru
      _
    // Predicated region
    $region14: #{lr_forward.1} parent=1 // pred_check
      _
    $region15: #{lr_forward.1} parent=1 // pred_check_branch
      %27 = sbr.rel (0) target = $region17
    $region16: #{lr_forward.1} parent=1 // pred_region
      %29 = dma.done [#allocation4], 128
    $region17: #{lr_forward.1} parent=1 // pred_fallthru
      _
    %v31 = vld [vmem:[#allocation3] sm:$0xff]
    %v32 = vpack.c.bf16 %v31, %v31
    %v33 = vld [vmem:[%s1] sm:$0x1]
    %v34 = vpack.c.bf16 %v33, %v33
    %s35 = sld [smem:[#allocation2]]
    %v36 = vstv %s35
    %vm37 = vcmask 171008
    %v39 = vsel %vm37, %v34, 0
    %v42 = vsel %vm37, %v32, 0
    %44 = vmatpush.bf16.xpose.msra.mxu0 0
    %45 = vmatpush.bf16.xpose.msra.mxu0 0
    %46 = vmatpush.bf16.xpose.msra.mxu0 0
    %47 = vmatpush.bf16.xpose.msra.mxu0 0
    %48 = vmatpush.bf16.xpose.msra.mxu0 0
    %49 = vmatpush.bf16.xpose.msra.mxu0 0
    %50 = vmatpush.bf16.xpose.msra.mxu0 0
    %51 = vmatpush.bf16.xpose.msra.mxu0 %v42
    %52 = vmatmul.bf16.gmra.mxu0 %v39
    %v53 = vpop.f32.mrf.mxu0
    %v54 = vadd.f32 %v36, %v53
    %v55 = vpop.f32.mrf.mxu0
    %56 = vdwg.mxu0
    %v57 = vxor.u32 %v54, 2147483648
    %v58 = vmul.f32 %v57, 1.442695
    %v59 = vpow.pop %v58
    %v60 = vadd.f32 %v59, 1.0
    %v61 = vrcp.pop %v60
    %v62 = vmul.f32 %v60, %v61
    %v63 = vsub.f32 1.0, %v62
    %v64 = vmul.f32 %v61, %v63
    %v65 = vadd.f32 %v61, %v64
    %vm66 = vweird.f32 %v60
    %vm67 = vweird.f32 %v61
    %vm68 = vmor %vm66, %vm67
    %v69 = vsel %vm68, %v61, %v65
    %v70 = vand.u32 2147483647, %v60
    %vm71 = vcmp.eq.f32.partialorder %v70, 8.507059e+37
    %v72 = vand.u32 %v60, 2147483648
    %v73 = vor.u32 1.1754944e-38, %v72
    %v74 = vsel %vm71, %v73, %v69
    %v75 = vmul.f32 1.0, %v74
    %vm76 = vcmask 57344
    %77 = vst.msk [vmem:[#allocation6] sm:$0x1] %vm76, %v75
    // Predicated region
    $region18: #{lr_forward.1} parent=1 // pred_check
      _
    $region19: #{lr_forward.1} parent=1 // pred_check_branch
      %79 = sbr.rel (0) target = $region21
    $region20: #{lr_forward.1} parent=1 // pred_region
      %81 = vsyncadd [#allocation5], 0
      %s83 = sshll.u32 [#allocation6], 4
      %s84 = int_to_ptr.vmem [resolvable:$true] %s83
      %s85 = sshll.u32 %s3, 4
      %s86 = int_to_ptr.hbm [resolvable:$true] %s85
      %88 = dma.vmem_to_hbm [thread:$0]  %s84, 16, %s86, [#allocation5]
    $region21: #{lr_forward.1} parent=1 // pred_fallthru
      _
    // Predicated region
    $region22: #{lr_forward.1} parent=1 // pred_check
      _
    $region23: #{lr_forward.1} parent=1 // pred_check_branch
      %90 = sbr.rel (0) target = $region25
    $region24: #{lr_forward.1} parent=1 // pred_region
      %92 = dma.done [#allocation5], 16
    $region25: #{lr_forward.1} parent=1 // pred_fallthru
      _
    %93 = vsyncpa [#allocation4], 1
    %94 = vsyncpa [#allocation5], 1

</llo_original>
